<compile_context>
chip_gen: v7x
topology: tpu7x:2x2x1
jax: 0.10.0
libtpu: 0.0.40
codegen_flags: <defaults>
</compile_context>

<pallas_src>
import functools

import jax
import jax.numpy as jnp
from jax import lax
from jax.experimental import pallas as pl
from jax.experimental.pallas import tpu as pltpu

SMOOTH = 1.0

# Per-grid-step HBM byte budget summed over both inputs (one buffer each).
# Double-buffered this is ~8 MiB of VMEM plus f32 temporaries -- comfortably
# inside the 48 MiB scoped limit below on every generation (v7x physical VMEM
# is 64 MiB/TC; v5e/v6e have 128 MiB).
TARGET_STEP_BYTES = 4 * 1024 * 1024
MAX_ROW_TILE = 1024           # (sample, class) rows per block (sublane axis)
MAX_COL_TILE = 32768          # flattened-spatial columns per block (lane axis)
VMEM_LIMIT_BYTES = 48 * 1024 * 1024


def _round_up(x, m):
    return ((x + m - 1) // m) * m


def _sublane_min(dtype):
    """Minimum sublane tile for a dtype: 8 (32-bit), 16 (16-bit), 32 (8-bit)."""
    bits = jnp.dtype(dtype).itemsize * 8
    return max(8, 256 // bits)


def _pick_tiles(r, s, bytes_per_elem, sub):
    """Pick (row_tile, col_tile) so one grid step moves ~TARGET_STEP_BYTES."""
    row_tile = min(MAX_ROW_TILE, _round_up(r, sub))
    # v7x has two TensorCores: keep >= 2 blocks on the "parallel" row axis
    # whenever the row count allows it so both cores get work.
    if r > sub and pl.cdiv(r, row_tile) < 2:
        row_tile = _round_up(pl.cdiv(r, 2), sub)
    # Fill the per-step byte budget with spatial columns (multiple of 128).
    col_budget = (TARGET_STEP_BYTES // (row_tile * bytes_per_elem)) // 128 * 128
    col_budget = max(128, min(col_budget, MAX_COL_TILE))
    if s <= col_budget:
        col_tile = s             # full spatial extent -> always a legal block
        # Spatial axis fits one block: grow the row tile toward the budget,
        # keeping >= 2 row blocks when we have them (dual-TC).
        if pl.cdiv(r, row_tile) > 1:
            want = (TARGET_STEP_BYTES // (max(s, 1) * bytes_per_elem)) // sub * sub
            want = min(want, MAX_ROW_TILE, _round_up(pl.cdiv(r, 2), sub))
            row_tile = max(row_tile, want)
    else:
        col_tile = col_budget
    return row_tile, col_tile


def _dice_sums_kernel(p_ref, t_ref, out_ref, *, col_tile, s):
    # p_ref/t_ref: (row_tile, col_tile) VMEM tiles; one row = one (n, c) pair.
    # out_ref:     (row_tile, 2) f32 accumulator resident across the column
    #              axis: lane 0 = sum(p*t), lane 1 = sum(p) + sum(t).
    k = pl.program_id(1)
    num_col = pl.num_programs(1)

    @pl.when(k == 0)
    def _init():
        out_ref[...] = jnp.zeros_like(out_ref)

    # Upcast in-vreg: inputs may be bf16 / int8 / bool (narrow dtypes cut HBM
    # traffic on this purely bandwidth-bound kernel; no-op for f32).
    p = p_ref[...].astype(jnp.float32)
    t = t_ref[...].astype(jnp.float32)

    def _accumulate(pv, tv):
        inter = jnp.sum(pv * tv, axis=-1, keepdims=True)
        denom = jnp.sum(pv + tv, axis=-1, keepdims=True)   # one reduce for sum(p)+sum(t)
        out_ref[...] += jnp.concatenate([inter, denom], axis=-1)

    if s % col_tile != 0:
        # Only the tail column block is partial -- gate the iota/compare/select
        # so every other step stays mask-free.
        @pl.when(k < num_col - 1)
        def _full():
            _accumulate(p, t)

        @pl.when(k == num_col - 1)
        def _tail():
            col = lax.broadcasted_iota(jnp.int32, p.shape, dimension=1)
            valid = (k * col_tile + col) < s
            _accumulate(jnp.where(valid, p, 0.0), jnp.where(valid, t, 0.0))
    else:
        _accumulate(p, t)


def soft_dice_loss(inpt, targ, weights=None, smooth=SMOOTH, col_tile=None):
    """inpt, targ: (N, C, H, W).  inpt = probabilities, targ = one-hot targets.

    targ (and inpt) may be narrow dtypes (int8/bool one-hot, bf16 probs); they
    are upcast inside the kernel, which roughly halves HBM traffic vs f32.
    `col_tile` overrides the auto spatial tile (testing / tuning only).
    """
    n, c, h, w = inpt.shape
    s = h * w
    r = n * c

    # Reshape only -- no wrapper-side casts or padding (extra HBM passes).
    p2 = inpt.reshape(r, s)
    t2 = targ.reshape(r, s)

    bpe = p2.dtype.itemsize + t2.dtype.itemsize
    sub = max(_sublane_min(p2.dtype), _sublane_min(t2.dtype))
    row_tile, auto_col = _pick_tiles(r, s, bpe, sub)
    if col_tile is None:
        col_tile = auto_col
    else:
        col_tile = min(col_tile, s)
        if col_tile < s:
            col_tile = max(128, (col_tile // 128) * 128)   # keep block legal

    num_row = pl.cdiv(r, row_tile)
    num_col = pl.cdiv(s, col_tile)

    kernel = functools.partial(_dice_sums_kernel, col_tile=col_tile, s=s)

    sums = pl.pallas_call(
        kernel,
        out_shape=jax.ShapeDtypeStruct((r, 2), jnp.float32),
        grid_spec=pltpu.PrefetchScalarGridSpec(
            num_scalar_prefetch=0,
            grid=(num_row, num_col),              # reduction (spatial) axis last
            in_specs=[pl.BlockSpec((row_tile, col_tile), lambda i, k: (i, k)),
                      pl.BlockSpec((row_tile, col_tile), lambda i, k: (i, k))],
            out_specs=pl.BlockSpec((row_tile, 2), lambda i, k: (i, 0)),
        ),
        compiler_params=pltpu.CompilerParams(
            dimension_semantics=("parallel", "arbitrary"),
            vmem_limit_bytes=VMEM_LIMIT_BYTES),
    )(p2, t2)

    inter = sums[:, 0].reshape(n, c)
    denom = sums[:, 1].reshape(n, c)
    dice = (2.0 * inter + smooth) / (denom + smooth)            # (N, C)
    if weights is not None:
        dice = dice * jnp.asarray(weights, dtype=dice.dtype)    # per-class weights
    return 1.0 - jnp.mean(dice)


class Dice:
    """JAX/Pallas equivalent of torch_kit.loss.Dice (optionally weighted)."""

    def __init__(self, weights=None, device=None):
        # `device` accepted for API parity; JAX manages placement itself.
        self.weights = None if weights is None else jnp.asarray(weights, jnp.float32)

    def __call__(self, inpt, targ):
        return soft_dice_loss(inpt, targ, self.weights)


def _reference_soft_dice_loss(inpt, targ, weights=None, smooth=SMOOTH):
    p = inpt.astype(jnp.float32)
    t = targ.astype(jnp.float32)
    inter = jnp.sum(p * t, axis=(2, 3))
    denom = jnp.sum(p, axis=(2, 3)) + jnp.sum(t, axis=(2, 3))
    dice = (2.0 * inter + smooth) / (denom + smooth)
    if weights is not None:
        dice = dice * jnp.asarray(weights, dtype=dice.dtype)
    return 1.0 - jnp.mean(dice)


if __name__ == "__main__":
    key = jax.random.PRNGKey(0)

    def make_inputs(subkey, N, C, H, W, onehot_dtype=jnp.float32):
        k_logits, k_labels = jax.random.split(subkey)
        logits = jax.random.normal(k_logits, (N, C, H, W), dtype=jnp.float32)
        probs = jax.nn.softmax(logits, axis=1)                           # NCHW probs
        labels = jax.random.randint(k_labels, (N, H, W), 0, C)
        onehot = jax.nn.one_hot(labels, C, axis=1, dtype=onehot_dtype)   # NCHW one-hot
        return probs, onehot

    k0, k1, k2 = jax.random.split(key, 3)

    # 1) primary small case (single block, f32 targets)
    w4 = [0.1, 0.2, 0.3, 0.4]
    inpt, targ = make_inputs(k0, 2, 4, 16, 16)
    loss = Dice(weights=w4)(inpt, targ)
    jax.block_until_ready(loss)
    ref = _reference_soft_dice_loss(inpt, targ, w4)
    assert jnp.allclose(loss, ref, atol=1e-5, rtol=1e-5), (loss, ref)

    # 2) int8 one-hot targets + forced spatial tiling with a partial (masked)
    #    tail column block (s = 48*48 = 2304, col_tile = 1024 -> 3 col steps)
    w8 = [0.05, 0.10, 0.15, 0.20, 0.10, 0.15, 0.10, 0.15]
    inpt2, targ2 = make_inputs(k1, 4, 8, 48, 48, onehot_dtype=jnp.int8)
    loss2 = soft_dice_loss(inpt2, targ2, w8, col_tile=1024)
    jax.block_until_ready(loss2)
    ref2 = _reference_soft_dice_loss(inpt2, targ2, w8)
    assert jnp.allclose(loss2, ref2, atol=1e-5, rtol=1e-5), (loss2, ref2)

    # 3) unweighted, r = N*C not a multiple of the row tile (partial row block,
    #    2 parallel row blocks) and a non-128-multiple spatial extent
    inpt3, targ3 = make_inputs(k2, 3, 5, 12, 12)
    loss3 = Dice()(inpt3, targ3)
    jax.block_until_ready(loss3)
    ref3 = _reference_soft_dice_loss(inpt3, targ3, None)
    assert jnp.allclose(loss3, ref3, atol=1e-5, rtol=1e-5), (loss3, ref3)

    print("KERNEL_OK")
</pallas_src>

<mosaic_0001>
module attributes {stable_mosaic.version = 11 : i64} {
  func.func @_dice_sums_kernel(%arg0: i32, %arg1: i32, %arg2: memref<8x256xf32, #tpu.memory_space<vmem>>, %arg3: memref<8x256xf32, #tpu.memory_space<vmem>>, %arg4: memref<8x2xf32, #tpu.memory_space<vmem>>) attributes {dimension_semantics = [#tpu.dimension_semantics<parallel>, #tpu.dimension_semantics<arbitrary>], iteration_bounds = array<i64: 1, 1>, scalar_prefetch = 0 : i64, scratch_operands = 0 : i64, tpu.core_type = #tpu.core_type<tc>, window_params = [{transform_indices = @transform_0, window_bounds = array<i64: 8, 256>}, {transform_indices = @transform_1, window_bounds = array<i64: 8, 256>}, {transform_indices = @transform_2, window_bounds = array<i64: 8, 2>}]} {
    %c0_i32 = arith.constant 0 : i32
    %0 = arith.cmpi eq, %arg1, %c0_i32 : i32
    %1 = arith.extui %0 : i1 to i32
    %c0_i32_0 = arith.constant 0 : i32
    %2 = arith.cmpi ne, %1, %c0_i32_0 : i32
    scf.if %2 {
      %cst_9 = arith.constant 0.000000e+00 : f32
      %15 = vector.broadcast %cst_9 : f32 to vector<8x2xf32>
      %c0_10 = arith.constant 0 : index
      %c0_11 = arith.constant 0 : index
      %16 = vector.load %arg4[%c0_10, %c0_11] : memref<8x2xf32, #tpu.memory_space<vmem>>, vector<8x2xf32>
      tpu.vector_store %arg4[%c0_10, %c0_11], %15 {strides = array<i32>} : memref<8x2xf32, #tpu.memory_space<vmem>>, vector<8x2xf32>,
    } else {
    }
    %c0 = arith.constant 0 : index
    %c0_1 = arith.constant 0 : index
    %3 = vector.load %arg2[%c0, %c0_1] : memref<8x256xf32, #tpu.memory_space<vmem>>, vector<8x256xf32>
    %c0_2 = arith.constant 0 : index
    %c0_3 = arith.constant 0 : index
    %4 = vector.load %arg3[%c0_2, %c0_3] : memref<8x256xf32, #tpu.memory_space<vmem>>, vector<8x256xf32>
    %5 = arith.mulf %3, %4 : vector<8x256xf32>
    %cst = arith.constant dense<0.000000e+00> : vector<8xf32>
    %6 = vector.multi_reduction <add>, %5, %cst [1] : vector<8x256xf32> to vector<8xf32>
    %7 = vector.shape_cast %6 : vector<8xf32> to vector<8x1xf32>
    %8 = arith.addf %3, %4 : vector<8x256xf32>
    %cst_4 = arith.constant dense<0.000000e+00> : vector<8xf32>
    %9 = vector.multi_reduction <add>, %8, %cst_4 [1] : vector<8x256xf32> to vector<8xf32>
    %10 = vector.shape_cast %9 : vector<8xf32> to vector<8x1xf32>
    %c0_5 = arith.constant 0 : index
    %c0_6 = arith.constant 0 : index
    %11 = vector.load %arg4[%c0_5, %c0_6] : memref<8x2xf32, #tpu.memory_space<vmem>>, vector<8x2xf32>
    %12 = tpu.concatenate %7, %10 in 1 : vector<8x1xf32>, vector<8x1xf32> -> vector<8x2xf32>
    %13 = arith.addf %11, %12 : vector<8x2xf32>
    %c0_7 = arith.constant 0 : index
    %c0_8 = arith.constant 0 : index
    %14 = vector.load %arg4[%c0_7, %c0_8] : memref<8x2xf32, #tpu.memory_space<vmem>>, vector<8x2xf32>
    tpu.vector_store %arg4[%c0_7, %c0_8], %13 {strides = array<i32>} : memref<8x2xf32, #tpu.memory_space<vmem>>, vector<8x2xf32>,
    return
  }
  func.func @transform_0(%arg0: i32, %arg1: i32) -> (i32, i32) {
    %c0_i32 = arith.constant 0 : i32
    return %arg0, %arg1 : i32, i32
  }
  func.func @transform_1(%arg0: i32, %arg1: i32) -> (i32, i32) {
    %c0_i32 = arith.constant 0 : i32
    return %arg0, %arg1 : i32, i32
  }
  func.func @transform_2(%arg0: i32, %arg1: i32) -> (i32, i32) {
    %c0_i32 = arith.constant 0 : i32
    %c0_i32_0 = arith.constant 0 : i32
    return %arg0, %c0_i32 : i32, i32
  }
}

</mosaic_0001>

<llo_original>
// kernel: tpu_custom_call.1
$region0: #{tpu_custom_call.1}
  #allocation0 [shape = 'u32[]', space=smem, size = 0x4, offset = 0x4, fixed_abs, tag = 'smem constant byte address 0x4 - core index']
  #allocation1 [shape = 'u32[144,128]{1,0:T(1,128)}', space=vmem, size = 0x12000, scoped, tag = 'internal scratch']
  %s0 = inlined_call_operand.hbm [shape: f32[8,256], index: 0, kind: input, shape index: {}]
  %s1 = inlined_call_operand.hbm [shape: f32[8,256], index: 1, kind: input, shape index: {}]
  %s2 = inlined_call_operand.vmem [shape: f32[8,2], index: 2, kind: output, shape index: {}]
  %s3 = sld [smem:[#allocation0]]
  $region30: #{tpu_custom_call.1} parent=0
    _
  %s5 = ssub.s32 1, %s3
  %s6 = scalar_select 0, %s5, %s3
  $region1: #{tpu_custom_call.1} parent=0
    #allocation2 [shape = 'u8[8192]{0}', space=vmem, size = 0x2000, scoped, tag = 'input window, operand 0, single buffered']
    #allocation3 [shape = 's32[1]{0}', space=sflag, size = 0x4, scoped, tag = 'scoped memory for tpu_custom_call.1']
    #allocation4 [shape = 'u8[8192]{0}', space=vmem, size = 0x2000, scoped, tag = 'input window, operand 1, single buffered']
    #allocation5 [shape = 's32[1]{0}', space=sflag, size = 0x4, scoped, tag = 'scoped memory for tpu_custom_call.1']
    %7 = vsyncpa [#allocation3], 0
    %8 = vsyncpa [#allocation5], 0
    // Predicated region
    $region2: #{tpu_custom_call.1} parent=1 // pred_check
      _
    $region3: #{tpu_custom_call.1} parent=1 // pred_check_branch
      %10 = sbr.rel (0) target = $region5
    $region4: #{tpu_custom_call.1} parent=1 // pred_region
      %s12 = ssub.s32 256, 256
      %13 = vsyncadd [#allocation3], %s12
      %s15 = sshll.u32 [#allocation2], 4
      %s16 = int_to_ptr.vmem [resolvable:$true] %s15
      %18 = dma.hbm_to_vmem [thread:$0]  %s0, 256, %s16, [#allocation3]
    $region5: #{tpu_custom_call.1} parent=1 // pred_fallthru
      _
    // Predicated region
    $region6: #{tpu_custom_call.1} parent=1 // pred_check
      _
    $region7: #{tpu_custom_call.1} parent=1 // pred_check_branch
      %20 = sbr.rel (0) target = $region9
    $region8: #{tpu_custom_call.1} parent=1 // pred_region
      %s22 = ssub.s32 256, 256
      %23 = vsyncadd [#allocation5], %s22
      %s25 = sshll.u32 [#allocation4], 4
      %s26 = int_to_ptr.vmem [resolvable:$true] %s25
      %28 = dma.hbm_to_vmem [thread:$0]  %s1, 256, %s26, [#allocation5]
    $region9: #{tpu_custom_call.1} parent=1 // pred_fallthru
      _
    // Predicated region
    $region10: #{tpu_custom_call.1} parent=1 // pred_check
      _
    $region11: #{tpu_custom_call.1} parent=1 // pred_check_branch
      %30 = sbr.rel (0) target = $region13
    $region12: #{tpu_custom_call.1} parent=1 // pred_region
      %31 = dma.done [#allocation3], 256
    $region13: #{tpu_custom_call.1} parent=1 // pred_fallthru
      _
    // Predicated region
    $region14: #{tpu_custom_call.1} parent=1 // pred_check
      _
    $region15: #{tpu_custom_call.1} parent=1 // pred_check_branch
      %33 = sbr.rel (0) target = $region17
    $region16: #{tpu_custom_call.1} parent=1 // pred_region
      %34 = dma.done [#allocation5], 256
    $region17: #{tpu_custom_call.1} parent=1 // pred_fallthru
      _
    %p35 = scmp.eq.s32.totalorder 0, 0
    // Predicated region
    $region18: #{tpu_custom_call.1} parent=1 // pred_check
      %p36 = pneg %p35
    $region19: #{tpu_custom_call.1} parent=1 // pred_check_branch
      %38 = sbr.rel (%p36) target = $region21
    $region20: #{tpu_custom_call.1} parent=1 // pred_region
      %vm39 = vcmask 15360
      %40 = vst.msk [vmem:[%s2] sm:$0xff] %vm39, 0.0
    $region21: #{tpu_custom_call.1} parent=1 // pred_fallthru
      _
    %v41 = vld [vmem:[#allocation2] sm:$0xff]
    %v42 = vld [vmem:[#allocation2 + $0x8] sm:$0xff]
    %v43 = vld [vmem:[#allocation4] sm:$0xff]
    %v44 = vld [vmem:[#allocation4 + $0x8] sm:$0xff]
    %v45 = vmul.f32 %v41, %v43
    %v46 = vmul.f32 %v42, %v44
    %v47 = vadd.f32 %v45, %v46
    %48 = vadd.xlane.f32.xlu0 %v47
    %v49 = vpop.xlane.xlu0 %48
    %v50 = vadd.f32 %v41, %v43
    %v51 = vadd.f32 %v42, %v44
    %v52 = vadd.f32 %v50, %v51
    %53 = vadd.xlane.f32.xlu0 %v52
    %v54 = vpop.xlane.xlu0 %53
    %v55 = vld [vmem:[%s2] sm:$0xff]
    %vm56 = vcmask 7168
    %v57 = vsel %vm56, %v49, %v54
    %v58 = vadd.f32 %v55, %v57
    %vm59 = vcmask 15360
    %60 = vst.msk [vmem:[%s2] sm:$0xff] %vm59, %v58
    // Predicated region
    $region22: #{tpu_custom_call.1} parent=1 // pred_check
      _
    $region23: #{tpu_custom_call.1} parent=1 // pred_check_branch
      %62 = sbr.rel (0) target = $region25
    $region24: #{tpu_custom_call.1} parent=1 // pred_region
      _
    $region25: #{tpu_custom_call.1} parent=1 // pred_fallthru
      _
    // Predicated region
    $region26: #{tpu_custom_call.1} parent=1 // pred_check
      _
    $region27: #{tpu_custom_call.1} parent=1 // pred_check_branch
      %64 = sbr.rel (0) target = $region29
    $region28: #{tpu_custom_call.1} parent=1 // pred_region
      _
    $region29: #{tpu_custom_call.1} parent=1 // pred_fallthru
      _
    %65 = vsyncpa [#allocation3], 1
    %66 = vsyncpa [#allocation5], 1

</llo_original>
